<compile_context>
chip_gen: v7x
topology: tpu7x:2x2x1
jax: 0.10.0
libtpu: 0.0.40
codegen_flags: <defaults>
</compile_context>

<pallas_src>
import jax
import jax.numpy as jnp
from jax import lax
from jax.experimental import pallas as pl
from jax.experimental.pallas import tpu as pltpu


def _round_up(x, m):
    return ((x + m - 1) // m) * m


def bert_pooler_kernel(x_ref, w_ref, b_ref, o_ref):
    # x_ref: (tb, H_in)    first-token activations for this batch tile
    # w_ref: (H_out, H_in) dense weight in PyTorch nn.Linear layout (NOT transposed)
    # b_ref: (1, H_out)    dense bias
    # o_ref: (tb, H_out)   pooled output tile
    x = x_ref[...]
    # x @ w.T without ever materializing w.T in HBM: contract the in_features axis
    # of both operands directly on the MXU, accumulating in f32.
    y = lax.dot_general(
        x,
        w_ref[...],
        dimension_numbers=(((1,), (1,)), ((), ())),
        preferred_element_type=jnp.float32,
    )
    y = y + b_ref[...].astype(jnp.float32)          # VPU broadcast add
    o_ref[...] = jnp.tanh(y).astype(o_ref.dtype)    # EUP tanh, cast on store


def bert_pooler(hidden_states, weight, bias, *, block_b=256):
    """pooled = tanh(hidden_states[:, 0] @ weight.T + bias)

    hidden_states: (B, S, H)   f32 or bf16
    weight:        (H, H)      PyTorch nn.Linear layout (out_features, in_features)
    bias:          (H,)
    returns:       (B, H)      same dtype as hidden_states
    """
    B, S, H = hidden_states.shape
    out_dtype = hidden_states.dtype

    # First-token selection stays a strided slice at the call boundary, but
    # allow_input_fusion (below) lets XLA fuse it — and any pad — straight into the
    # Pallas input DMA instead of writing a (B, H) intermediate back to HBM.
    first = hidden_states[:, 0, :]                  # (B, H)
    b2 = bias.reshape(1, H)

    # Batch tiling:
    #  * B <= block_b  -> single tile: weight is DMA'd exactly once, no padding, and
    #    (important on dual-TC v7x) the grid is deliberately NOT split, since each
    #    extra grid block would re-read the dominant (H, H) weight from HBM.
    #  * B  > block_b  -> size tb so the last tile has minimal zero-padding, rounded
    #    up to the 8-row sublane granule; independent tiles are marked "parallel".
    if B <= block_b:
        tb = B
    else:
        n_target = pl.cdiv(B, block_b)
        tb = min(block_b, _round_up(pl.cdiv(B, n_target), 8))
    n_blocks = pl.cdiv(B, tb)
    b_padded = n_blocks * tb
    if b_padded != B:
        first = jnp.pad(first, ((0, b_padded - B), (0, 0)))

    itemsize = jnp.dtype(out_dtype).itemsize
    w_itemsize = jnp.dtype(weight.dtype).itemsize

    # Advisory cost for XLA's scheduler (this custom call is tiny; accurate costs let
    # XLA overlap it with surrounding ops instead of treating it as opaque).
    cost = pl.CostEstimate(
        flops=2 * B * H * H,
        transcendentals=B * H,
        bytes_accessed=H * H * w_itemsize + 2 * B * H * itemsize + H * w_itemsize,
    )

    # Scoped-VMEM budget: single-buffered weight + double-buffered x/out tiles + bias,
    # with 2x headroom, floored at 32 MiB and capped at 128 MiB.  Keeps large-H f32
    # configs compiling on v5e's 16 MiB default and stays honest on v7x's 64 MiB part.
    est = (H * H * w_itemsize                # weight, single-buffered
           + 2 * 2 * tb * H * itemsize       # x + out tiles, double-buffered
           + 2 * H * w_itemsize)             # bias
    vmem_limit = int(min(128 * 1024 * 1024, max(32 * 1024 * 1024, 2 * est)))

    def _call(single_buffer_constants):
        const_kwargs = {}
        if single_buffer_constants:
            # Weight/bias index_maps never change across the grid: single-buffer them
            # so the resident weight costs H*H of VMEM once instead of twice.
            const_kwargs = dict(pipeline_mode=pl.Buffered(1))
        return pl.pallas_call(
            bert_pooler_kernel,
            out_shape=jax.ShapeDtypeStruct((b_padded, H), out_dtype),
            grid=(n_blocks,),
            in_specs=[
                pl.BlockSpec((tb, H), lambda i: (i, 0)),                  # batch tile
                pl.BlockSpec((H, H), lambda i: (0, 0), **const_kwargs),   # weight (resident)
                pl.BlockSpec((1, H), lambda i: (0, 0), **const_kwargs),   # bias   (resident)
            ],
            out_specs=pl.BlockSpec((tb, H), lambda i: (i, 0)),
            compiler_params=pltpu.CompilerParams(
                dimension_semantics=("parallel",),       # independent batch tiles
                allow_input_fusion=[True, False, False],  # fuse slice/pad into input DMA
                vmem_limit_bytes=vmem_limit,
            ),
            cost_estimate=cost,
        )(first, weight, b2)

    try:
        out = _call(True)
    except Exception:
        # Older jax without pl.Buffered(1) support on pallas_call: fall back to the
        # default double-buffered constants (previously validated configuration).
        out = _call(False)

    return out[:B]

    # TODO(synk): for hidden sizes whose weight exceeds even the single-buffered VMEM
    # budget, add an output-feature grid axis (weight BlockSpec (H, tn)); K=H stays
    # resident so no accumulator is needed.


def ref_forward(hidden_states, weight, bias):
    first = hidden_states[:, 0, :]
    return jnp.tanh(first @ weight.T + bias)


if __name__ == "__main__":
    # Small config consistent with BertPooler: batch=2, seq=8, hidden=32.
    B, S, H = 2, 8, 32

    key = jax.random.PRNGKey(0)
    k_h, k_w, k_b = jax.random.split(key, 3)

    hidden_states = jax.random.normal(k_h, (B, S, H), dtype=jnp.float32)
    weight = 0.02 * jax.random.normal(k_w, (H, H), dtype=jnp.float32)   # (out, in)
    bias = 0.02 * jax.random.normal(k_b, (H,), dtype=jnp.float32)

    ref = ref_forward(hidden_states, weight, bias)

    # f32 path.
    out = jax.block_until_ready(bert_pooler(hidden_states, weight, bias))
    assert out.shape == (B, H)
    assert jnp.allclose(out, ref, atol=1e-5, rtol=1e-5)

    # bf16 path: halves the dominant weight HBM read, MXU still accumulates in f32.
    out_bf16 = jax.block_until_ready(
        bert_pooler(
            hidden_states.astype(jnp.bfloat16),
            weight.astype(jnp.bfloat16),
            bias.astype(jnp.bfloat16),
        )
    )
    assert out_bf16.shape == (B, H) and out_bf16.dtype == jnp.bfloat16
    assert jnp.allclose(out_bf16.astype(jnp.float32), ref, atol=2e-2, rtol=2e-2)

    print("KERNEL_OK")
</pallas_src>

<mosaic_0001>
module attributes {stable_mosaic.version = 11 : i64} {
  func.func @bert_pooler_kernel(%arg0: i32, %arg1: memref<2x32xf32, #tpu.memory_space<vmem>>, %arg2: memref<32x32xf32, #tpu.memory_space<vmem>>, %arg3: memref<1x32xf32, #tpu.memory_space<vmem>>, %arg4: memref<2x32xf32, #tpu.memory_space<vmem>>) attributes {dimension_semantics = [#tpu.dimension_semantics<parallel>], iteration_bounds = array<i64: 1>, scalar_prefetch = 0 : i64, scratch_operands = 0 : i64, tpu.core_type = #tpu.core_type<tc>, window_params = [{transform_indices = @transform_0, window_bounds = array<i64: 2, 32>}, {pipeline_mode = #tpu.pipeline_mode<synchronous>, transform_indices = @transform_1, window_bounds = array<i64: 32, 32>}, {pipeline_mode = #tpu.pipeline_mode<synchronous>, transform_indices = @transform_2, window_bounds = array<i64: 1, 32>}, {transform_indices = @transform_3, window_bounds = array<i64: 2, 32>}]} {
    %c0 = arith.constant 0 : index
    %c0_0 = arith.constant 0 : index
    %0 = vector.load %arg1[%c0, %c0_0] : memref<2x32xf32, #tpu.memory_space<vmem>>, vector<2x32xf32>
    %c0_1 = arith.constant 0 : index
    %c0_2 = arith.constant 0 : index
    %1 = vector.load %arg2[%c0_1, %c0_2] : memref<32x32xf32, #tpu.memory_space<vmem>>, vector<32x32xf32>
    %cst = arith.constant dense<0.000000e+00> : vector<2x32xf32>
    %2 = tpu.matmul %0, %1, %cst {dimension_numbers = #tpu.dot_dimension_numbers<[1], [1], [0], [0], [0, 0, 1, 0], [], []>} : vector<2x32xf32>, vector<32x32xf32>, vector<2x32xf32> -> vector<2x32xf32>
    %c0_3 = arith.constant 0 : index
    %c0_4 = arith.constant 0 : index
    %3 = vector.load %arg3[%c0_3, %c0_4] : memref<1x32xf32, #tpu.memory_space<vmem>>, vector<1x32xf32>
    %4 = vector.broadcast %3 : vector<1x32xf32> to vector<2x32xf32>
    %5 = arith.addf %2, %4 : vector<2x32xf32>
    %6 = math.tanh %5 : vector<2x32xf32>
    %c0_5 = arith.constant 0 : index
    %c0_6 = arith.constant 0 : index
    %7 = vector.load %arg4[%c0_5, %c0_6] : memref<2x32xf32, #tpu.memory_space<vmem>>, vector<2x32xf32>
    tpu.vector_store %arg4[%c0_5, %c0_6], %6 {strides = array<i32>} : memref<2x32xf32, #tpu.memory_space<vmem>>, vector<2x32xf32>,
    return
  }
  func.func @transform_0(%arg0: i32) -> (i32, i32) {
    %c0_i32 = arith.constant 0 : i32
    %c0_i32_0 = arith.constant 0 : i32
    return %arg0, %c0_i32 : i32, i32
  }
  func.func @transform_1(%arg0: i32) -> (i32, i32) {
    %c0_i32 = arith.constant 0 : i32
    %c0_i32_0 = arith.constant 0 : i32
    %c0_i32_1 = arith.constant 0 : i32
    return %c0_i32, %c0_i32_0 : i32, i32
  }
  func.func @transform_2(%arg0: i32) -> (i32, i32) {
    %c0_i32 = arith.constant 0 : i32
    %c0_i32_0 = arith.constant 0 : i32
    %c0_i32_1 = arith.constant 0 : i32
    return %c0_i32, %c0_i32_0 : i32, i32
  }
  func.func @transform_3(%arg0: i32) -> (i32, i32) {
    %c0_i32 = arith.constant 0 : i32
    %c0_i32_0 = arith.constant 0 : i32
    return %arg0, %c0_i32 : i32, i32
  }
}

module attributes {stable_mosaic.version = 11 : i64} {
  func.func @bert_pooler_kernel(%arg0: i32, %arg1: memref<2x32xf32, #tpu.memory_space<vmem>>, %arg2: memref<32x32xf32, #tpu.memory_space<vmem>>, %arg3: memref<1x32xf32, #tpu.memory_space<vmem>>, %arg4: memref<2x32xf32, #tpu.memory_space<vmem>>) attributes {dimension_semantics = [#tpu.dimension_semantics<parallel>], iteration_bounds = array<i64: 1>, scalar_prefetch = 0 : i64, scratch_operands = 0 : i64, tpu.core_type = #tpu.core_type<tc>, window_params = [{transform_indices = @transform_0, window_bounds = array<i64: 2, 32>}, {pipeline_mode = #tpu.pipeline_mode<synchronous>, transform_indices = @transform_1, window_bounds = array<i64: 32, 32>}, {pipeline_mode = #tpu.pipeline_mode<synchronous>, transform_indices = @transform_2, window_bounds = array<i64: 1, 32>}, {transform_indices = @transform_3, window_bounds = array<i64: 2, 32>}]} {
    %c0 = arith.constant 0 : index
    %c0_0 = arith.constant 0 : index
    %0 = vector.load %arg1[%c0, %c0_0] : memref<2x32xf32, #tpu.memory_space<vmem>>, vector<2x32xf32>
    %c0_1 = arith.constant 0 : index
    %c0_2 = arith.constant 0 : index
    %1 = vector.load %arg2[%c0_1, %c0_2] : memref<32x32xf32, #tpu.memory_space<vmem>>, vector<32x32xf32>
    %cst = arith.constant dense<0.000000e+00> : vector<2x32xf32>
    %2 = tpu.matmul %0, %1, %cst {dimension_numbers = #tpu.dot_dimension_numbers<[1], [1], [0], [0], [0, 0, 1, 0], [], []>} : vector<2x32xf32>, vector<32x32xf32>, vector<2x32xf32> -> vector<2x32xf32>
    %c0_3 = arith.constant 0 : index
    %c0_4 = arith.constant 0 : index
    %3 = vector.load %arg3[%c0_3, %c0_4] : memref<1x32xf32, #tpu.memory_space<vmem>>, vector<1x32xf32>
    %4 = vector.broadcast %3 : vector<1x32xf32> to vector<2x32xf32>
    %5 = arith.addf %2, %4 : vector<2x32xf32>
    %6 = math.tanh %5 : vector<2x32xf32>
    %c0_5 = arith.constant 0 : index
    %c0_6 = arith.constant 0 : index
    %7 = vector.load %arg4[%c0_5, %c0_6] : memref<2x32xf32, #tpu.memory_space<vmem>>, vector<2x32xf32>
    tpu.vector_store %arg4[%c0_5, %c0_6], %6 {strides = array<i32>} : memref<2x32xf32, #tpu.memory_space<vmem>>, vector<2x32xf32>,
    return
  }
  func.func @transform_0(%arg0: i32) -> (i32, i32) {
    %c0_i32 = arith.constant 0 : i32
    %c0_i32_0 = arith.constant 0 : i32
    return %arg0, %c0_i32 : i32, i32
  }
  func.func @transform_1(%arg0: i32) -> (i32, i32) {
    %c0_i32 = arith.constant 0 : i32
    %c0_i32_0 = arith.constant 0 : i32
    %c0_i32_1 = arith.constant 0 : i32
    return %c0_i32, %c0_i32_0 : i32, i32
  }
  func.func @transform_2(%arg0: i32) -> (i32, i32) {
    %c0_i32 = arith.constant 0 : i32
    %c0_i32_0 = arith.constant 0 : i32
    %c0_i32_1 = arith.constant 0 : i32
    return %c0_i32, %c0_i32_0 : i32, i32
  }
  func.func @transform_3(%arg0: i32) -> (i32, i32) {
    %c0_i32 = arith.constant 0 : i32
    %c0_i32_0 = arith.constant 0 : i32
    return %arg0, %c0_i32 : i32, i32
  }
}

</mosaic_0001>

<llo_original>
// kernel: tpu_custom_call.1
$region0: #{tpu_custom_call.1}
  #allocation0 [shape = 'u32[]', space=smem, size = 0x4, offset = 0x4, fixed_abs, tag = 'smem constant byte address 0x4 - core index']
  #allocation1 [shape = 'u32[144,128]{1,0:T(1,128)}', space=vmem, size = 0x12000, scoped, tag = 'internal scratch']
  %s0 = inlined_call_operand.hbm [shape: f32[2,32], index: 0, kind: input, shape index: {}]
  %s1 = inlined_call_operand.hbm [shape: f32[32,32], index: 1, kind: input, shape index: {}]
  %s2 = inlined_call_operand.vmem [shape: f32[1,32], index: 2, kind: input, shape index: {}]
  %s3 = inlined_call_operand.hbm [shape: f32[2,32], index: 3, kind: output, shape index: {}]
  %s4 = sld [smem:[#allocation0]]
  $region30: #{tpu_custom_call.1} parent=0
    _
  %s6 = ssub.s32 1, %s4
  %s7 = scalar_select 0, %s6, %s4
  $region1: #{tpu_custom_call.1} parent=0
    #allocation2 [shape = 'u8[1024]{0}', space=vmem, size = 0x400, scoped, tag = 'input window, operand 0, single buffered']
    #allocation3 [shape = 's32[1]{0}', space=sflag, size = 0x4, scoped, tag = 'scoped memory for tpu_custom_call.1']
    #allocation4 [shape = 's32[1]{0}', space=sflag, size = 0x4, scoped, tag = 'scoped memory for tpu_custom_call.1']
    #allocation5 [shape = 'u8[16384]{0}', space=vmem, size = 0x4000, scoped, tag = 'input window, operand 1, single buffered']
    #allocation6 [shape = 's32[1]{0}', space=sflag, size = 0x4, scoped, tag = 'scoped memory for tpu_custom_call.1']
    #allocation7 [shape = 'u8[1024]{0}', space=vmem, size = 0x400, scoped, tag = 'output window, operand 0, single buffered']
    %8 = vsyncpa [#allocation3], 0
    %9 = vsyncpa [#allocation6], 0
    %10 = vsyncpa [#allocation4], 0
    // Predicated region
    $region2: #{tpu_custom_call.1} parent=1 // pred_check
      _
    $region3: #{tpu_custom_call.1} parent=1 // pred_check_branch
      %12 = sbr.rel (0) target = $region5
    $region4: #{tpu_custom_call.1} parent=1 // pred_region
      %s14 = ssub.s32 32, 32
      %15 = vsyncadd [#allocation3], %s14
      %s17 = sshll.u32 [#allocation2], 4
      %s18 = int_to_ptr.vmem [resolvable:$true] %s17
      %20 = dma.hbm_to_vmem [thread:$0]  %s0, 32, %s18, [#allocation3]
    $region5: #{tpu_custom_call.1} parent=1 // pred_fallthru
      _
    // Predicated region
    $region6: #{tpu_custom_call.1} parent=1 // pred_check
      _
    $region7: #{tpu_custom_call.1} parent=1 // pred_check_branch
      %22 = sbr.rel (0) target = $region9
    $region8: #{tpu_custom_call.1} parent=1 // pred_region
      %s24 = ssub.s32 512, 512
      %25 = vsyncadd [#allocation6], %s24
      %s26 = sshll.u32 [#allocation5], 4
      %s27 = int_to_ptr.vmem [resolvable:$true] %s26
      %32 = dma.hbm_to_vmem [thread:$0]  %s1, 512, %s27, [#allocation6], 128, 128, 8
    $region9: #{tpu_custom_call.1} parent=1 // pred_fallthru
      _
    // Predicated region
    $region10: #{tpu_custom_call.1} parent=1 // pred_check
      _
    $region11: #{tpu_custom_call.1} parent=1 // pred_check_branch
      %34 = sbr.rel (0) target = $region13
    $region12: #{tpu_custom_call.1} parent=1 // pred_region
      _
    $region13: #{tpu_custom_call.1} parent=1 // pred_fallthru
      _
    // Predicated region
    $region14: #{tpu_custom_call.1} parent=1 // pred_check
      _
    $region15: #{tpu_custom_call.1} parent=1 // pred_check_branch
      %36 = sbr.rel (0) target = $region17
    $region16: #{tpu_custom_call.1} parent=1 // pred_region
      %37 = dma.done [#allocation3], 32
    $region17: #{tpu_custom_call.1} parent=1 // pred_fallthru
      _
    // Predicated region
    $region18: #{tpu_custom_call.1} parent=1 // pred_check
      _
    $region19: #{tpu_custom_call.1} parent=1 // pred_check_branch
      %39 = sbr.rel (0) target = $region21
    $region20: #{tpu_custom_call.1} parent=1 // pred_region
      %40 = dma.done [#allocation6], 512
    $region21: #{tpu_custom_call.1} parent=1 // pred_fallthru
      _
    %v41 = vld [vmem:[#allocation2] sm:$0x3]
    %v42 = vld [vmem:[#allocation5] sm:$0xff]
    %v43 = vld [vmem:[#allocation5 + $0x8] sm:$0xff]
    %v44 = vld [vmem:[#allocation5 + $0x10] sm:$0xff]
    %v45 = vld [vmem:[#allocation5 + $0x18] sm:$0xff]
    %v46 = vld [vmem:[%s2] sm:$0x1]
    %v48 = vlaneseq
    %v49 = vshrl.u32 %v48, 7
    %v50 = vsub.s32 0, %v49
    %v51 = vrot.slane %v46, %v50
    %vm53 = vcmask 261120
    %v55 = vsel %vm53, %v41, 0
    %v58 = vsel %vm53, %v42, 0
    %v61 = vsel %vm53, %v43, 0
    %v64 = vsel %vm53, %v44, 0
    %v67 = vsel %vm53, %v45, 0
    %69 = vmatprep.subr.mxu0 0.0
    %70 = vmatpush1.xpose.msra.mxu0 %v58
    %71 = vmatprep.subr.mxu0 0.0
    %72 = vmatpush1.xpose.msra.mxu0 %v61
    %73 = vmatprep.subr.mxu0 0.0
    %74 = vmatpush1.xpose.msra.mxu0 %v64
    %75 = vmatprep.subr.mxu0 0.0
    %76 = vmatpush1.xpose.msra.mxu0 %v67
    %77 = vmatprep.subr.mxu0 0.0
    %78 = vmatpush1.xpose.msra.mxu0 0.0
    %79 = vmatprep.subr.mxu0 0.0
    %80 = vmatpush1.xpose.msra.mxu0 0.0
    %81 = vmatprep.subr.mxu0 0.0
    %82 = vmatpush1.xpose.msra.mxu0 0.0
    %83 = vmatprep.subr.mxu0 0.0
    %84 = vmatpush1.xpose.msra.mxu0 0.0
    %85 = vmatprep.subr.mxu0 0.0
    %86 = vmatpush1.xpose.msra.mxu0 0.0
    %87 = vmatprep.subr.mxu0 0.0
    %88 = vmatpush1.xpose.msra.mxu0 0.0
    %89 = vmatprep.subr.mxu0 0.0
    %90 = vmatpush1.xpose.msra.mxu0 0.0
    %91 = vmatprep.subr.mxu0 0.0
    %92 = vmatpush1.xpose.msra.mxu0 0.0
    %93 = vmatprep.subr.mxu0 0.0
    %94 = vmatpush1.xpose.msra.mxu0 0.0
    %95 = vmatprep.subr.mxu0 0.0
    %96 = vmatpush1.xpose.msra.mxu0 0.0
    %97 = vmatprep.subr.mxu0 0.0
    %98 = vmatpush1.xpose.msra.mxu0 0.0
    %99 = vmatprep.subr.mxu0 0.0
    %100 = vmatpush1.xpose.msra.mxu0 0.0
    %101 = vmatprep.subr.mxu0 0.0
    %102 = vmatpush1.xpose.msra.mxu0 0.0
    %103 = vmatprep.subr.mxu0 0.0
    %104 = vmatpush1.xpose.msra.mxu0 0.0
    %105 = vmatprep.subr.mxu0 0.0
    %106 = vmatpush1.xpose.msra.mxu0 0.0
    %107 = vmatprep.subr.mxu0 0.0
    %108 = vmatpush1.xpose.msra.mxu0 0.0
    %109 = vmatprep.subr.mxu0 0.0
    %110 = vmatpush1.xpose.msra.mxu0 0.0
    %111 = vmatprep.subr.mxu0 0.0
    %112 = vmatpush1.xpose.msra.mxu0 0.0
    %113 = vmatprep.subr.mxu0 0.0
    %114 = vmatpush1.xpose.msra.mxu0 0.0
    %115 = vmatprep.subr.mxu0 0.0
    %116 = vmatpush1.xpose.msra.mxu0 0.0
    %117 = vmatprep.subr.mxu0 0.0
    %118 = vmatpush1.xpose.msra.mxu0 0.0
    %119 = vmatprep.subr.mxu0 0.0
    %120 = vmatpush1.xpose.msra.mxu0 0.0
    %121 = vmatprep.subr.mxu0 0.0
    %122 = vmatpush1.xpose.msra.mxu0 0.0
    %123 = vmatprep.subr.mxu0 0.0
    %124 = vmatpush1.xpose.msra.mxu0 0.0
    %125 = vmatprep.subr.mxu0 0.0
    %126 = vmatpush1.xpose.msra.mxu0 0.0
    %127 = vmatprep.subr.mxu0 0.0
    %128 = vmatpush1.xpose.msra.mxu0 0.0
    %129 = vmatprep.subr.mxu0 0.0
    %130 = vmatpush1.xpose.msra.mxu0 0.0
    %131 = vmatprep.subr.mxu0 0.0
    %132 = vmatpush1.xpose.msra.mxu0 0.0
    %133 = vmatprep.mubr.f32.mxu0 0.0
    %134 = vmatmul.mubr.f32.gmra.mrb[0].mxu0 %v55
    %v135 = vpop.f32.mrb[0].mxu0
    %v136 = vadd.f32 %v51, %v135
    %v137 = vpop.f32.mrb[0].mxu0
    %138 = vdwg.mxu0
    %v139 = vtanh.pop %v136
    %vm140 = vcmask 254976
    %141 = vst.msk [vmem:[#allocation7] sm:$0x3] %vm140, %v139
    // Predicated region
    $region22: #{tpu_custom_call.1} parent=1 // pred_check
      _
    $region23: #{tpu_custom_call.1} parent=1 // pred_check_branch
      %143 = sbr.rel (0) target = $region25
    $region24: #{tpu_custom_call.1} parent=1 // pred_region
      %s145 = ssub.s32 32, 32
      %146 = vsyncadd [#allocation4], %s145
      %s148 = sshll.u32 [#allocation7], 4
      %s149 = int_to_ptr.vmem [resolvable:$true] %s148
      %151 = dma.vmem_to_hbm [thread:$0]  %s149, 32, %s3, [#allocation4]
    $region25: #{tpu_custom_call.1} parent=1 // pred_fallthru
      _
    // Predicated region
    $region26: #{tpu_custom_call.1} parent=1 // pred_check
      _
    $region27: #{tpu_custom_call.1} parent=1 // pred_check_branch
      %153 = sbr.rel (0) target = $region29
    $region28: #{tpu_custom_call.1} parent=1 // pred_region
      %154 = dma.done [#allocation4], 32
    $region29: #{tpu_custom_call.1} parent=1 // pred_fallthru
      _
    %155 = vsyncpa [#allocation3], 1
    %156 = vsyncpa [#allocation6], 1
    %157 = vsyncpa [#allocation4], 1

// kernel: tpu_custom_call.1
$region0: #{tpu_custom_call.1}
  #allocation0 [shape = 'u32[]', space=smem, size = 0x4, offset = 0x4, fixed_abs, tag = 'smem constant byte address 0x4 - core index']
  #allocation1 [shape = 'u32[144,128]{1,0:T(1,128)}', space=vmem, size = 0x12000, scoped, tag = 'internal scratch']
  %s0 = inlined_call_operand.hbm [shape: f32[2,32], index: 0, kind: input, shape index: {}]
  %s1 = inlined_call_operand.hbm [shape: f32[32,32], index: 1, kind: input, shape index: {}]
  %s2 = inlined_call_operand.vmem [shape: f32[1,32], index: 2, kind: input, shape index: {}]
  %s3 = inlined_call_operand.hbm [shape: f32[2,32], index: 3, kind: output, shape index: {}]
  %s4 = sld [smem:[#allocation0]]
  $region30: #{tpu_custom_call.1} parent=0
    _
  %s6 = ssub.s32 1, %s4
  %s7 = scalar_select 0, %s6, %s4
  $region1: #{tpu_custom_call.1} parent=0
    #allocation2 [shape = 'u8[1024]{0}', space=vmem, size = 0x400, scoped, tag = 'input window, operand 0, single buffered']
    #allocation3 [shape = 's32[1]{0}', space=sflag, size = 0x4, scoped, tag = 'scoped memory for tpu_custom_call.1']
    #allocation4 [shape = 's32[1]{0}', space=sflag, size = 0x4, scoped, tag = 'scoped memory for tpu_custom_call.1']
    #allocation5 [shape = 'u8[16384]{0}', space=vmem, size = 0x4000, scoped, tag = 'input window, operand 1, single buffered']
    #allocation6 [shape = 's32[1]{0}', space=sflag, size = 0x4, scoped, tag = 'scoped memory for tpu_custom_call.1']
    #allocation7 [shape = 'u8[1024]{0}', space=vmem, size = 0x400, scoped, tag = 'output window, operand 0, single buffered']
    %8 = vsyncpa [#allocation3], 0
    %9 = vsyncpa [#allocation6], 0
    %10 = vsyncpa [#allocation4], 0
    // Predicated region
    $region2: #{tpu_custom_call.1} parent=1 // pred_check
      _
    $region3: #{tpu_custom_call.1} parent=1 // pred_check_branch
      %12 = sbr.rel (0) target = $region5
    $region4: #{tpu_custom_call.1} parent=1 // pred_region
      %s14 = ssub.s32 32, 32
      %15 = vsyncadd [#allocation3], %s14
      %s17 = sshll.u32 [#allocation2], 4
      %s18 = int_to_ptr.vmem [resolvable:$true] %s17
      %20 = dma.hbm_to_vmem [thread:$0]  %s0, 32, %s18, [#allocation3]
    $region5: #{tpu_custom_call.1} parent=1 // pred_fallthru
      _
    // Predicated region
    $region6: #{tpu_custom_call.1} parent=1 // pred_check
      _
    $region7: #{tpu_custom_call.1} parent=1 // pred_check_branch
      %22 = sbr.rel (0) target = $region9
    $region8: #{tpu_custom_call.1} parent=1 // pred_region
      %s24 = ssub.s32 512, 512
      %25 = vsyncadd [#allocation6], %s24
      %s26 = sshll.u32 [#allocation5], 4
      %s27 = int_to_ptr.vmem [resolvable:$true] %s26
      %32 = dma.hbm_to_vmem [thread:$0]  %s1, 512, %s27, [#allocation6], 128, 128, 8
    $region9: #{tpu_custom_call.1} parent=1 // pred_fallthru
      _
    // Predicated region
    $region10: #{tpu_custom_call.1} parent=1 // pred_check
      _
    $region11: #{tpu_custom_call.1} parent=1 // pred_check_branch
      %34 = sbr.rel (0) target = $region13
    $region12: #{tpu_custom_call.1} parent=1 // pred_region
      _
    $region13: #{tpu_custom_call.1} parent=1 // pred_fallthru
      _
    // Predicated region
    $region14: #{tpu_custom_call.1} parent=1 // pred_check
      _
    $region15: #{tpu_custom_call.1} parent=1 // pred_check_branch
      %36 = sbr.rel (0) target = $region17
    $region16: #{tpu_custom_call.1} parent=1 // pred_region
      %37 = dma.done [#allocation3], 32
    $region17: #{tpu_custom_call.1} parent=1 // pred_fallthru
      _
    // Predicated region
    $region18: #{tpu_custom_call.1} parent=1 // pred_check
      _
    $region19: #{tpu_custom_call.1} parent=1 // pred_check_branch
      %39 = sbr.rel (0) target = $region21
    $region20: #{tpu_custom_call.1} parent=1 // pred_region
      %40 = dma.done [#allocation6], 512
    $region21: #{tpu_custom_call.1} parent=1 // pred_fallthru
      _
    %v41 = vld [vmem:[#allocation2] sm:$0x3]
    %v42 = vld [vmem:[#allocation5] sm:$0xff]
    %v43 = vld [vmem:[#allocation5 + $0x8] sm:$0xff]
    %v44 = vld [vmem:[#allocation5 + $0x10] sm:$0xff]
    %v45 = vld [vmem:[#allocation5 + $0x18] sm:$0xff]
    %v46 = vld [vmem:[%s2] sm:$0x1]
    %v48 = vlaneseq
    %v49 = vshrl.u32 %v48, 7
    %v50 = vsub.s32 0, %v49
    %v51 = vrot.slane %v46, %v50
    %vm53 = vcmask 261120
    %v55 = vsel %vm53, %v41, 0
    %v58 = vsel %vm53, %v42, 0
    %v61 = vsel %vm53, %v43, 0
    %v64 = vsel %vm53, %v44, 0
    %v67 = vsel %vm53, %v45, 0
    %69 = vmatprep.subr.mxu0 0.0
    %70 = vmatpush1.xpose.msra.mxu0 %v58
    %71 = vmatprep.subr.mxu0 0.0
    %72 = vmatpush1.xpose.msra.mxu0 %v61
    %73 = vmatprep.subr.mxu0 0.0
    %74 = vmatpush1.xpose.msra.mxu0 %v64
    %75 = vmatprep.subr.mxu0 0.0
    %76 = vmatpush1.xpose.msra.mxu0 %v67
    %77 = vmatprep.subr.mxu0 0.0
    %78 = vmatpush1.xpose.msra.mxu0 0.0
    %79 = vmatprep.subr.mxu0 0.0
    %80 = vmatpush1.xpose.msra.mxu0 0.0
    %81 = vmatprep.subr.mxu0 0.0
    %82 = vmatpush1.xpose.msra.mxu0 0.0
    %83 = vmatprep.subr.mxu0 0.0
    %84 = vmatpush1.xpose.msra.mxu0 0.0
    %85 = vmatprep.subr.mxu0 0.0
    %86 = vmatpush1.xpose.msra.mxu0 0.0
    %87 = vmatprep.subr.mxu0 0.0
    %88 = vmatpush1.xpose.msra.mxu0 0.0
    %89 = vmatprep.subr.mxu0 0.0
    %90 = vmatpush1.xpose.msra.mxu0 0.0
    %91 = vmatprep.subr.mxu0 0.0
    %92 = vmatpush1.xpose.msra.mxu0 0.0
    %93 = vmatprep.subr.mxu0 0.0
    %94 = vmatpush1.xpose.msra.mxu0 0.0
    %95 = vmatprep.subr.mxu0 0.0
    %96 = vmatpush1.xpose.msra.mxu0 0.0
    %97 = vmatprep.subr.mxu0 0.0
    %98 = vmatpush1.xpose.msra.mxu0 0.0
    %99 = vmatprep.subr.mxu0 0.0
    %100 = vmatpush1.xpose.msra.mxu0 0.0
    %101 = vmatprep.subr.mxu0 0.0
    %102 = vmatpush1.xpose.msra.mxu0 0.0
    %103 = vmatprep.subr.mxu0 0.0
    %104 = vmatpush1.xpose.msra.mxu0 0.0
    %105 = vmatprep.subr.mxu0 0.0
    %106 = vmatpush1.xpose.msra.mxu0 0.0
    %107 = vmatprep.subr.mxu0 0.0
    %108 = vmatpush1.xpose.msra.mxu0 0.0
    %109 = vmatprep.subr.mxu0 0.0
    %110 = vmatpush1.xpose.msra.mxu0 0.0
    %111 = vmatprep.subr.mxu0 0.0
    %112 = vmatpush1.xpose.msra.mxu0 0.0
    %113 = vmatprep.subr.mxu0 0.0
    %114 = vmatpush1.xpose.msra.mxu0 0.0
    %115 = vmatprep.subr.mxu0 0.0
    %116 = vmatpush1.xpose.msra.mxu0 0.0
    %117 = vmatprep.subr.mxu0 0.0
    %118 = vmatpush1.xpose.msra.mxu0 0.0
    %119 = vmatprep.subr.mxu0 0.0
    %120 = vmatpush1.xpose.msra.mxu0 0.0
    %121 = vmatprep.subr.mxu0 0.0
    %122 = vmatpush1.xpose.msra.mxu0 0.0
    %123 = vmatprep.subr.mxu0 0.0
    %124 = vmatpush1.xpose.msra.mxu0 0.0
    %125 = vmatprep.subr.mxu0 0.0
    %126 = vmatpush1.xpose.msra.mxu0 0.0
    %127 = vmatprep.subr.mxu0 0.0
    %128 = vmatpush1.xpose.msra.mxu0 0.0
    %129 = vmatprep.subr.mxu0 0.0
    %130 = vmatpush1.xpose.msra.mxu0 0.0
    %131 = vmatprep.subr.mxu0 0.0
    %132 = vmatpush1.xpose.msra.mxu0 0.0
    %133 = vmatprep.mubr.f32.mxu0 0.0
    %134 = vmatmul.mubr.f32.gmra.mrb[0].mxu0 %v55
    %v135 = vpop.f32.mrb[0].mxu0
    %v136 = vadd.f32 %v51, %v135
    %v137 = vpop.f32.mrb[0].mxu0
    %138 = vdwg.mxu0
    %v139 = vtanh.pop %v136
    %vm140 = vcmask 254976
    %141 = vst.msk [vmem:[#allocation7] sm:$0x3] %vm140, %v139
    // Predicated region
    $region22: #{tpu_custom_call.1} parent=1 // pred_check
      _
    $region23: #{tpu_custom_call.1} parent=1 // pred_check_branch
      %143 = sbr.rel (0) target = $region25
    $region24: #{tpu_custom_call.1} parent=1 // pred_region
      %s145 = ssub.s32 32, 32
      %146 = vsyncadd [#allocation4], %s145
      %s148 = sshll.u32 [#allocation7], 4
      %s149 = int_to_ptr.vmem [resolvable:$true] %s148
      %151 = dma.vmem_to_hbm [thread:$0]  %s149, 32, %s3, [#allocation4]
    $region25: #{tpu_custom_call.1} parent=1 // pred_fallthru
      _
    // Predicated region
    $region26: #{tpu_custom_call.1} parent=1 // pred_check
      _
    $region27: #{tpu_custom_call.1} parent=1 // pred_check_branch
      %153 = sbr.rel (0) target = $region29
    $region28: #{tpu_custom_call.1} parent=1 // pred_region
      %154 = dma.done [#allocation4], 32
    $region29: #{tpu_custom_call.1} parent=1 // pred_fallthru
      _
    %155 = vsyncpa [#allocation3], 1
    %156 = vsyncpa [#allocation6], 1
    %157 = vsyncpa [#allocation4], 1

</llo_original>
